<compile_context>
chip_gen: v7x
topology: tpu7x:2x2x1
jax: 0.10.0
libtpu: 0.0.40
codegen_flags: <defaults>
</compile_context>

<pallas_src>
import functools

import jax
import jax.numpy as jnp
from jax.experimental import pallas as pl
from jax.experimental.pallas import tpu as pltpu

_LOG2E = 1.4426950408889634


def _rbf_body(a_ref, b_ref, o_ref, *, neg_l_log2e, dim):
    """o[r, c] = exp2(neg_l_log2e * sum_d (a[r, d] - b[d, c])**2).

    a_ref : (R, dim)  row-wise points
    b_ref : (dim, C)  column-wise points
    o_ref : (R, C)    lane-dense output tile
    dim is tiny (2 for the meshgrid inducing states), so the distance
    accumulation is a short unrolled VPU loop; the exp2 goes to the EUP.
    """
    a = a_ref[...]
    b = b_ref[...]
    diff = a[:, 0:1] - b[0:1, :]
    acc = diff * diff
    for d in range(1, dim):
        diff = a[:, d:d + 1] - b[d:d + 1, :]
        acc = acc + diff * diff
    # TODO(synk): for large dim, switch to the MXU ||a||^2 + ||b||^2 - 2ab
    #             expansion with a K grid axis ("arbitrary") and f32 accumulator.
    o_ref[...] = jnp.exp2(acc * neg_l_log2e)


def _axis_tiling(size, tile_max, align, min_blocks=1):
    """Split `size` into `steps` tiles (multiple of `align`), minimizing padding."""
    steps = max(min_blocks, pl.cdiv(size, tile_max))
    tile = align * pl.cdiv(pl.cdiv(size, steps), align)
    return tile, steps * tile, steps


def _vmem_limit(tile_bytes):
    # double-buffered tiles + slack, clipped to a budget safe on v7x (64 MiB).
    need = 2 * tile_bytes
    return int(min(max(2 * need + (4 << 20), 16 << 20), 48 << 20))


class InducedGaussianRBF:
    """Pallas implementation of Induced_GaussianRBF (forward pass)."""

    def __init__(self, num_inducing, dim, l=20.0, normalize=True,
                 inducing_states=None, tm_max=512, tn_max=512):
        if inducing_states is None:
            if not normalize:
                raise ValueError("inducing_states required when normalize=False")
            x = jnp.linspace(-0.5, 0.5, num_inducing)
            y = jnp.linspace(-0.5, 0.5, num_inducing)
            X, Y = jnp.meshgrid(x, y)
            inducing_states = jnp.concatenate(
                [X.reshape(-1, 1), Y.reshape(-1, 1)], axis=1)
        s_hat = jnp.asarray(inducing_states, jnp.float32)          # (M, dim)
        self.s_hat = s_hat
        self.M, self.dim = s_hat.shape
        assert self.dim == dim
        self.l = float(l)
        self.tn_max = int(tn_max)

        # >= 2 M-blocks when there is enough work so both v7x TensorCores get a
        # block via dimension_semantics="parallel"; on v5e/v6e the extra grid
        # step only costs ~0.35 us.
        min_blocks = 2 if self.M >= 256 else 1

        # Small-n path layout: M on lanes, shat stored as (dim, Mp).
        self._tm_nm, mp_nm, _ = _axis_tiling(self.M, tm_max, 128, min_blocks)
        self._shat_t = jnp.pad(s_hat.T, ((0, 0), (0, mp_nm - self.M)))

        # Large-n path layout: M on sublanes, shat stored as (Mp, dim).
        self._tm_mn, mp_mn, _ = _axis_tiling(self.M, tm_max, 8, min_blocks)
        self._shat = jnp.pad(s_hat, ((0, mp_mn - self.M), (0, 0)))

    # ------------------------------------------------------------------ #

    def __call__(self, s):
        s = jnp.asarray(s, jnp.float32)
        s2 = s[:, None] if s.ndim == 1 else s                      # (dim, n)
        n = s2.shape[1]
        if n >= 128:
            return self._forward_mn(s2, n)
        return self._forward_nm(s2, n)

    # ------------------------------------------------------------------ #

    def _forward_nm(self, s2, n):
        """Small n: lane-dense (n, M) tiles, one tiny transpose at the end."""
        dim = self.dim
        npad = 8 * pl.cdiv(n, 8)                 # full (8,128) vst rows
        s_t = s2.T                               # (n, dim) -- tiny
        if npad != n:
            s_t = jnp.pad(s_t, ((0, npad - n), (0, 0)))
        tm = self._tm_nm
        mp = self._shat_t.shape[1]
        grid = (mp // tm,)

        kernel = functools.partial(_rbf_body, neg_l_log2e=-self.l * _LOG2E, dim=dim)
        cost = pl.CostEstimate(
            flops=(3 * dim + 1) * npad * mp,
            transcendentals=npad * mp,
            bytes_accessed=4 * (npad * dim + dim * mp + npad * mp))
        # VMEM tile bytes with (8,128) layout padding: query, shat tile, out tile.
        vmem = _vmem_limit(4 * (npad * 128 + 8 * tm + npad * tm))

        out_t = pl.pallas_call(
            kernel,
            out_shape=jax.ShapeDtypeStruct((npad, mp), jnp.float32),
            grid_spec=pltpu.PrefetchScalarGridSpec(
                num_scalar_prefetch=0,
                grid=grid,
                in_specs=[
                    pl.BlockSpec((npad, dim), lambda i: (0, 0)),   # queries (resident)
                    pl.BlockSpec((dim, tm), lambda i: (0, i)),     # inducing tile
                ],
                out_specs=pl.BlockSpec((npad, tm), lambda i: (0, i)),
            ),
            compiler_params=pltpu.CompilerParams(
                dimension_semantics=("parallel",),
                vmem_limit_bytes=vmem),
            cost_estimate=cost,
        )(s_t, self._shat_t)
        return out_t[:n, :self.M].T                                # (M, n)

    def _forward_mn(self, s2, n):
        """Large n: kernel emits the (M, n) orientation directly (no transpose)."""
        dim = self.dim
        tn, npd, n_steps = _axis_tiling(n, self.tn_max, 128)
        if npd != n:
            s2 = jnp.pad(s2, ((0, 0), (0, npd - n)))
        tm = self._tm_mn
        mp = self._shat.shape[0]
        grid = (mp // tm, n_steps)

        kernel = functools.partial(_rbf_body, neg_l_log2e=-self.l * _LOG2E, dim=dim)
        cost = pl.CostEstimate(
            flops=(3 * dim + 1) * mp * npd,
            transcendentals=mp * npd,
            bytes_accessed=4 * (mp * dim + dim * npd + mp * npd))
        vmem = _vmem_limit(4 * (tm * 128 + 8 * tn + tm * tn))

        out = pl.pallas_call(
            kernel,
            out_shape=jax.ShapeDtypeStruct((mp, npd), jnp.float32),
            grid_spec=pltpu.PrefetchScalarGridSpec(
                num_scalar_prefetch=0,
                grid=grid,
                in_specs=[
                    pl.BlockSpec((tm, dim), lambda i, j: (i, 0)),  # inducing tile
                    pl.BlockSpec((dim, tn), lambda i, j: (0, j)),  # query tile
                ],
                out_specs=pl.BlockSpec((tm, tn), lambda i, j: (i, j)),
            ),
            compiler_params=pltpu.CompilerParams(
                dimension_semantics=("parallel", "parallel"),
                vmem_limit_bytes=vmem),
            cost_estimate=cost,
        )(self._shat, s2)
        # TODO(synk): optionally store bf16 (halves the HBM write on v5e/v6e)
        #             when the downstream consumer of the RBF matrix accepts it.
        return out[:self.M, :n]                                    # (M, n)


def _reference(s, s_hat, l):
    # Mirrors the torch code: norm over the dim axis, then exp(-l * norm**2).
    s2 = s[:, None] if s.ndim == 1 else s                          # (dim, n)
    diff = s2[None, :, :] - s_hat[:, :, None] + 1e-22              # (M, dim, n)
    norm = jnp.linalg.norm(diff, axis=1)                           # (M, n)
    return jnp.exp(-l * norm ** 2)


if __name__ == "__main__":
    num_inducing = 16
    dim = 2
    l = 20.0

    rbf = InducedGaussianRBF(num_inducing, dim, l=l)               # s_hat: (256, 2)
    M = rbf.M

    key = jax.random.PRNGKey(0)
    k_small, k_large, k_1d = jax.random.split(key, 3)

    # Small-n path (n < 128): lane-dense (n, M) tiles + one cheap transpose.
    n_small = 8
    s_small = (0.5 * jax.random.normal(k_small, (dim, n_small))).astype(jnp.float32)
    out_small = jax.block_until_ready(rbf(s_small))
    ref_small = _reference(s_small, rbf.s_hat, l)
    assert out_small.shape == (M, n_small)
    assert jnp.allclose(out_small, ref_small, atol=1e-5, rtol=1e-5)

    # Large-n path (n >= 128): kernel emits (M, n) directly, tiled (m, n) grid.
    n_large = 256
    s_large = (0.5 * jax.random.normal(k_large, (dim, n_large))).astype(jnp.float32)
    out_large = jax.block_until_ready(rbf(s_large))
    ref_large = _reference(s_large, rbf.s_hat, l)
    assert out_large.shape == (M, n_large)
    assert jnp.allclose(out_large, ref_large, atol=1e-5, rtol=1e-5)

    # 1-D input path: single query state -> (M, 1) output.
    s1 = (0.5 * jax.random.normal(k_1d, (dim,))).astype(jnp.float32)
    out1 = jax.block_until_ready(rbf(s1))
    ref1 = _reference(s1, rbf.s_hat, l)
    assert out1.shape == (M, 1)
    assert jnp.allclose(out1, ref1, atol=1e-5, rtol=1e-5)

    print("KERNEL_OK")
</pallas_src>

<mosaic_0001>
module attributes {stable_mosaic.version = 11 : i64} {
  func.func @_rbf_body(%arg0: i32, %arg1: memref<8x2xf32, #tpu.memory_space<vmem>>, %arg2: memref<2x128xf32, #tpu.memory_space<vmem>>, %arg3: memref<8x128xf32, #tpu.memory_space<vmem>>) attributes {dimension_semantics = [#tpu.dimension_semantics<parallel>], iteration_bounds = array<i64: 2>, scalar_prefetch = 0 : i64, scratch_operands = 0 : i64, tpu.core_type = #tpu.core_type<tc>, window_params = [{pipeline_mode = #tpu.pipeline_mode<synchronous>, transform_indices = @transform_0, window_bounds = array<i64: 8, 2>}, {transform_indices = @transform_1, window_bounds = array<i64: 2, 128>}, {transform_indices = @transform_2, window_bounds = array<i64: 8, 128>}]} {
    %c0 = arith.constant 0 : index
    %c0_0 = arith.constant 0 : index
    %0 = vector.load %arg1[%c0, %c0_0] : memref<8x2xf32, #tpu.memory_space<vmem>>, vector<8x2xf32>
    %c0_1 = arith.constant 0 : index
    %c0_2 = arith.constant 0 : index
    %1 = vector.load %arg2[%c0_1, %c0_2] : memref<2x128xf32, #tpu.memory_space<vmem>>, vector<2x128xf32>
    %2 = vector.extract_strided_slice %0 {offsets = [0, 0], sizes = [8, 1], strides = [1, 1]} : vector<8x2xf32> to vector<8x1xf32>
    %3 = vector.extract_strided_slice %1 {offsets = [0, 0], sizes = [1, 128], strides = [1, 1]} : vector<2x128xf32> to vector<1x128xf32>
    %4 = vector.broadcast %2 : vector<8x1xf32> to vector<8x128xf32>
    %5 = vector.broadcast %3 : vector<1x128xf32> to vector<8x128xf32>
    %6 = arith.subf %4, %5 : vector<8x128xf32>
    %7 = arith.mulf %6, %6 : vector<8x128xf32>
    %8 = vector.extract_strided_slice %0 {offsets = [0, 1], sizes = [8, 1], strides = [1, 1]} : vector<8x2xf32> to vector<8x1xf32>
    %9 = vector.extract_strided_slice %1 {offsets = [1, 0], sizes = [1, 128], strides = [1, 1]} : vector<2x128xf32> to vector<1x128xf32>
    %10 = vector.broadcast %8 : vector<8x1xf32> to vector<8x128xf32>
    %11 = vector.broadcast %9 : vector<1x128xf32> to vector<8x128xf32>
    %12 = arith.subf %10, %11 : vector<8x128xf32>
    %13 = arith.mulf %12, %12 : vector<8x128xf32>
    %14 = arith.addf %7, %13 : vector<8x128xf32>
    %cst = arith.constant -2.885390e+01 : f32
    %15 = vector.broadcast %cst : f32 to vector<8x128xf32>
    %16 = arith.mulf %14, %15 : vector<8x128xf32>
    %17 = math.exp2 %16 : vector<8x128xf32>
    %c0_3 = arith.constant 0 : index
    %c0_4 = arith.constant 0 : index
    %18 = vector.load %arg3[%c0_3, %c0_4] : memref<8x128xf32, #tpu.memory_space<vmem>>, vector<8x128xf32>
    tpu.vector_store %arg3[%c0_3, %c0_4], %17 {strides = array<i32>} : memref<8x128xf32, #tpu.memory_space<vmem>>, vector<8x128xf32>,
    return
  }
  func.func @transform_0(%arg0: i32) -> (i32, i32) {
    %c0_i32 = arith.constant 0 : i32
    %c0_i32_0 = arith.constant 0 : i32
    %c0_i32_1 = arith.constant 0 : i32
    return %c0_i32, %c0_i32_0 : i32, i32
  }
  func.func @transform_1(%arg0: i32) -> (i32, i32) {
    %c0_i32 = arith.constant 0 : i32
    %c0_i32_0 = arith.constant 0 : i32
    return %c0_i32, %arg0 : i32, i32
  }
  func.func @transform_2(%arg0: i32) -> (i32, i32) {
    %c0_i32 = arith.constant 0 : i32
    %c0_i32_0 = arith.constant 0 : i32
    return %c0_i32, %arg0 : i32, i32
  }
}

</mosaic_0001>

<llo_original>
// kernel: tpu_custom_call.1
$region0: #{tpu_custom_call.1}
  #allocation0 [shape = 'u32[]', space=smem, size = 0x4, offset = 0x4, fixed_abs, tag = 'smem constant byte address 0x4 - core index']
  #allocation1 [shape = 'u32[144,128]{1,0:T(1,128)}', space=vmem, size = 0x12000, scoped, tag = 'internal scratch']
  %s0 = inlined_call_operand.vmem [shape: f32[8,2], index: 0, kind: input, shape index: {}]
  %s1 = inlined_call_operand.vmem [shape: f32[2,256], index: 1, kind: input, shape index: {}]
  %s2 = inlined_call_operand.hbm [shape: f32[8,256], index: 2, kind: output, shape index: {}]
  %s3 = sld [smem:[#allocation0]]
  $region41: #{tpu_custom_call.1} parent=0
    _
  %s5 = ssub.s32 1, %s3
  %s6 = scalar_select 0, %s5, %s3
  $region1: #{tpu_custom_call.1} parent=0
    #allocation2 [shape = 'u8[8192]{0}', space=vmem, size = 0x2000, scoped, tag = 'output window, operand 0']
    #allocation3 [shape = 's32[2]{0}', space=sflag, size = 0x8, scoped, tag = 'scoped memory for tpu_custom_call.1']
    %7 = vsyncpa [#allocation3], 0
    %s8 = scalar_lea.sflag [#allocation3], 1
    %9 = vsyncpa %s8, 0
    loop: start=0, step=1, limit=4
    $region2: #{tpu_custom_call.1} parent=1 // loop_pre_header
      _
    $region3: #{tpu_custom_call.1} parent=1 // loop_header
      %s11 = sphi 0, %s15
      %p12 = scmp.ge.s32.totalorder %s11, 4
      %s19 = sphi 0, %s19
      %s21 = sphi 0, %s19
      %s22 = sphi 0, %s21
      %s36 = sphi 0, %s22
      %s42 = sphi 0, %s44
      %s45 = sphi 0, %s42
      %s46 = sphi 0, %s45
      %s62 = sphi 0, %s46
      %s68 = sphi 0, %s70
      %s71 = sphi 0, %s68
      %s72 = sphi 0, %s71
      %s88 = sphi 0, %s72
    $region4: #{tpu_custom_call.1} parent=1 // loop_header_branch
      %14 = sbr.rel (%p12) target = $region8
    $region5: #{tpu_custom_call.1} parent=1 // loop_body
      %s16 = ssub.s32 %s11, 1
      %s17 = ssub.s32 %s11, 2
      %s18 = sadd.s32 %s11, 1
      %s20 = sadd.s32 %s19, 1
      %p23 = scmp.eq.s32.totalorder %s11, 1
      %p24 = scmp.ne.s32.totalorder %s19, %s21
      %p25 = scmp.eq.s32.totalorder %s11, 0
      %p26 = por %p24, %p25
      %p27 = scmp.ne.s32.totalorder %s19, %s21
      %p28 = scmp.eq.s32.totalorder %s16, 1
      %p29 = por %p27, %p28
      %p30 = scmp.ne.s32.totalorder %s21, %s22
      %p31 = scmp.eq.s32.totalorder %s16, 0
      %p32 = por %p30, %p31
      %p33 = scmp.ne.s32.totalorder %s21, %s22
      %p34 = scmp.eq.s32.totalorder %s17, 1
      %p35 = por %p33, %p34
      %p37 = scmp.ne.s32.totalorder %s22, %s36
      %p38 = scmp.eq.s32.totalorder %s17, 0
      %p39 = por %p37, %p38
      %s40 = ssub.s32 %s11, %s18
      %p41 = scmp.eq.s32.totalorder %s40, 0
      %s43 = sadd.s32 %s42, 1
      %s44 = scalar_select %p41, %s42, %s43
      %p47 = pneg %p41
      %p48 = scmp.eq.s32.totalorder %s11, 1
      %p49 = por %p47, %p48
      %p50 = scmp.ne.s32.totalorder %s42, %s45
      %p51 = scmp.eq.s32.totalorder %s11, 0
      %p52 = por %p50, %p51
      %p53 = scmp.ne.s32.totalorder %s42, %s45
      %p54 = scmp.eq.s32.totalorder %s16, 1
      %p55 = por %p53, %p54
      %p56 = scmp.ne.s32.totalorder %s45, %s46
      %p57 = scmp.eq.s32.totalorder %s16, 0
      %p58 = por %p56, %p57
      %p59 = scmp.ne.s32.totalorder %s45, %s46
      %p60 = scmp.eq.s32.totalorder %s17, 1
      %p61 = por %p59, %p60
      %p63 = scmp.ne.s32.totalorder %s46, %s62
      %p64 = scmp.eq.s32.totalorder %s17, 0
      %p65 = por %p63, %p64
      %s66 = ssub.s32 %s11, %s18
      %p67 = scmp.eq.s32.totalorder %s66, 0
      %s69 = sadd.s32 %s68, 1
      %s70 = scalar_select %p67, %s68, %s69
      %p73 = pneg %p67
      %p74 = scmp.eq.s32.totalorder %s11, 1
      %p75 = por %p73, %p74
      %p76 = scmp.ne.s32.totalorder %s68, %s71
      %p77 = scmp.eq.s32.totalorder %s11, 0
      %p78 = por %p76, %p77
      %p79 = scmp.ne.s32.totalorder %s68, %s71
      %p80 = scmp.eq.s32.totalorder %s16, 1
      %p81 = por %p79, %p80
      %p82 = scmp.ne.s32.totalorder %s71, %s72
      %p83 = scmp.eq.s32.totalorder %s16, 0
      %p84 = por %p82, %p83
      %p85 = scmp.ne.s32.totalorder %s71, %s72
      %p86 = scmp.eq.s32.totalorder %s17, 1
      %p87 = por %p85, %p86
      %p89 = scmp.ne.s32.totalorder %s72, %s88
      %p90 = scmp.eq.s32.totalorder %s17, 0
      %p91 = por %p89, %p90
      %p92 = scmp.le.s32.totalorder 1, %s11
      %p93 = scmp.lt.s32.totalorder %s11, 3
      %p94 = pnand %p92, %p93
      %p95 = pneg %p94
      // Predicated region
      $region9: #{tpu_custom_call.1} parent=5 // pred_check
        _
      $region10: #{tpu_custom_call.1} parent=5 // pred_check_branch
        %97 = sbr.rel (%p94) target = $region12
      $region11: #{tpu_custom_call.1} parent=5 // pred_region
        %s98 = ssub.s32 %s11, 1
        // Predicated region
        $region13: #{tpu_custom_call.1} parent=11 // pred_check
          %p99 = pneg %p32
        $region14: #{tpu_custom_call.1} parent=11 // pred_check_branch
          %101 = sbr.rel (%p99) target = $region16
        $region15: #{tpu_custom_call.1} parent=11 // pred_region
          _
        $region16: #{tpu_custom_call.1} parent=11 // pred_fallthru
          _
      $region12: #{tpu_custom_call.1} parent=5 // pred_fallthru
        _
      %p102 = scmp.lt.s32.totalorder %s11, 2
      // Predicated region
      $region17: #{tpu_custom_call.1} parent=5 // pred_check
        %p103 = pneg %p102
      $region18: #{tpu_custom_call.1} parent=5 // pred_check_branch
        %105 = sbr.rel (%p103) target = $region20
      $region19: #{tpu_custom_call.1} parent=5 // pred_region
        // Predicated region
        $region21: #{tpu_custom_call.1} parent=19 // pred_check
          %p106 = pneg %p52
        $region22: #{tpu_custom_call.1} parent=19 // pred_check_branch
          %108 = sbr.rel (%p106) target = $region24
        $region23: #{tpu_custom_call.1} parent=19 // pred_region
          %p109 = scmp.lt.s32.totalorder %s11, 1
          %s110 = scalar_select %p109, %s11, 1
          %s111 = smul.addr %s110, 2
          %s112 = scalar_lea.vmem %s1, %s111
        $region24: #{tpu_custom_call.1} parent=19 // pred_fallthru
          _
      $region20: #{tpu_custom_call.1} parent=5 // pred_fallthru
        _
      %p113 = scmp.le.s32.totalorder 1, %s11
      %p114 = scmp.lt.s32.totalorder %s11, 3
      %p115 = pnand %p113, %p114
      %p116 = pneg %p115
      // Predicated region
      $region25: #{tpu_custom_call.1} parent=5 // pred_check
        _
      $region26: #{tpu_custom_call.1} parent=5 // pred_check_branch
        %118 = sbr.rel (%p115) target = $region28
      $region27: #{tpu_custom_call.1} parent=5 // pred_region
        %s119 = ssub.s32 %s11, 1
        %p120 = pneg %p32
        %p121 = pneg %p29
        %p122 = scmp.lt.s32.totalorder %s16, 1
        %s123 = scalar_select %p122, %s16, 1
        %s124 = smul.addr %s123, 2
        %s125 = scalar_lea.vmem %s1, %s124
        %p126 = pneg %p58
        %p127 = pneg %p55
        %p128 = pneg %p84
        %p129 = pneg %p81
        %s130 = sand.u32 %s71, 1
        %s131 = scalar_lea.sflag [#allocation3], %s130
        %s132 = sand.u32 %s71, 1
        %s133 = smul.addr %s132, 8
        %s134 = scalar_lea.vmem [#allocation2], %s133
        %p135 = scmp.lt.s32.totalorder %s16, 1
        %s136 = scalar_select %p135, %s16, 1
        %s137 = smul.addr %s136, 2
        %s138 = scalar_lea.vmem %s1, %s137
        %v139 = vld [vmem:[%s0] sm:$0xff]
        %v140 = vld [vmem:[%s138] sm:$0x3]
        %142 = vset.pattern.permute.xlu0 0
        %143 = vperm.xlu0 %142, %v139
        %v144 = vpop.permute.xlu0 %143
        %v146 = vlaneseq
        %v147 = vshrl.u32 %v146, 7
        %v148 = vsub.s32 0, %v147
        %v149 = vrot.slane %v140, %v148
        %v150 = vsub.f32 %v144, %v149
        %v151 = vmul.f32 %v150, %v150
        %152 = vset.pattern.permute.xlu0 1
        %153 = vperm.xlu0 %152, %v139
        %v154 = vpop.permute.xlu0 %153
        %v156 = vlaneseq
        %v157 = vshrl.u32 %v156, 7
        %v158 = vsub.s32 1, %v157
        %v159 = vrot.slane %v140, %v158
        %v160 = vsub.f32 %v154, %v159
        %v161 = vmul.f32 %v160, %v160
        %v162 = vadd.f32 %v151, %v161
        %v163 = vmul.f32 %v162, -28.8539
        %v164 = vpow.pop %v163
        %165 = vst [vmem:[%s134] sm:$0xff] %v164
        %s166 = sand.u32 %s71, 1
        %s167 = scalar_lea.sflag [#allocation3], %s166
        %s168 = sand.u32 %s71, 1
        %s169 = smul.addr %s168, 8
        %s170 = scalar_lea.vmem [#allocation2], %s169
        // Predicated region
        $region29: #{tpu_custom_call.1} parent=27 // pred_check
          %p171 = pneg %p81
        $region30: #{tpu_custom_call.1} parent=27 // pred_check_branch
          %173 = sbr.rel (%p171) target = $region32
        $region31: #{tpu_custom_call.1} parent=27 // pred_region
          %s175 = ssub.s32 128, 128
          %176 = vsyncadd %s167, %s175
          %s177 = smul.addr %s16, 128
          %s178 = scalar_lea.hbm %s2, %s177
          %s180 = sshll.u32 %s170, 4
          %s181 = int_to_ptr.vmem [resolvable:$true] %s180
          %183 = dma.vmem_to_hbm [thread:$0]  %s181, 128, %s178, %s167
        $region32: #{tpu_custom_call.1} parent=27 // pred_fallthru
          _
      $region28: #{tpu_custom_call.1} parent=5 // pred_fallthru
        _
      %p184 = scmp.le.s32.totalorder 2, %s11
      // Predicated region
      $region33: #{tpu_custom_call.1} parent=5 // pred_check
        %p185 = pneg %p184
      $region34: #{tpu_custom_call.1} parent=5 // pred_check_branch
        %187 = sbr.rel (%p185) target = $region36
      $region35: #{tpu_custom_call.1} parent=5 // pred_region
        %s188 = ssub.s32 %s11, 2
        // Predicated region
        $region37: #{tpu_custom_call.1} parent=35 // pred_check
          %p189 = pneg %p87
        $region38: #{tpu_custom_call.1} parent=35 // pred_check_branch
          %191 = sbr.rel (%p189) target = $region40
        $region39: #{tpu_custom_call.1} parent=35 // pred_region
          %s192 = sand.u32 %s72, 1
          %s193 = scalar_lea.sflag [#allocation3], %s192
          %s194 = sand.u32 %s72, 1
          %s195 = smul.addr %s194, 8
          %s196 = scalar_lea.vmem [#allocation2], %s195
          %197 = dma.done %s193, 128
        $region40: #{tpu_custom_call.1} parent=35 // pred_fallthru
          _
      $region36: #{tpu_custom_call.1} parent=5 // pred_fallthru
        _
    $region6: #{tpu_custom_call.1} parent=1 // loop_footer
      %s15 = sadd.s32 1, %s11
    $region7: #{tpu_custom_call.1} parent=1 // loop_footer_branch
      %10 = sbr.rel target = $region3
    $region8: #{tpu_custom_call.1} parent=1 // loop_exit
      _
    %198 = vsyncpa [#allocation3], 1
    %s199 = scalar_lea.sflag [#allocation3], 1
    %200 = vsyncpa %s199, 1

</llo_original>
